<compile_context>
chip_gen: v7x
topology: tpu7x:2x2x1
jax: 0.10.0
libtpu: 0.0.40
codegen_flags: <defaults>
</compile_context>

<pallas_src>
import jax
import jax.numpy as jnp
from jax.experimental import pallas as pl
from jax.experimental.pallas import tpu as pltpu


# ----------------------------- kernels -------------------------------------


def _support_kernel(x_ref, w_ref, o_ref):
    # (tm_s, Din) @ (Din, Dout_p) -> (tm_s, Dout_p), stored in the MXU dtype.
    o_ref[...] = jnp.dot(
        x_ref[...], w_ref[...], preferred_element_type=jnp.float32
    ).astype(o_ref.dtype)


def _agg_kernel(adj_ref, s_ref, o_ref):
    # adj_ref: (tm, tk), s_ref: (tk, Dout_p), o_ref: (tm, Dout_p) f32.
    # The output block is resident across the k grid axis (index_map ignores k),
    # so we accumulate directly into it -- no VMEM scratch, no epilogue copy.
    @pl.when(pl.program_id(2) == 0)
    def _():
        o_ref[...] = jnp.zeros_like(o_ref)

    o_ref[...] += jnp.dot(
        adj_ref[...], s_ref[...], preferred_element_type=jnp.float32
    )


def _agg_bias_kernel(adj_ref, s_ref, b_ref, o_ref):
    _agg_kernel(adj_ref, s_ref, o_ref)

    @pl.when(pl.program_id(2) == pl.num_programs(2) - 1)
    def _():
        o_ref[...] += b_ref[...]


def _fused_kernel(adj_ref, x_ref, w_ref, o_ref):
    # adj_ref: (tm, tk), x_ref: (tk, Din), w_ref: (Din, Dout_p) (constant block),
    # o_ref: (tm, Dout_p) f32, resident across k.
    @pl.when(pl.program_id(2) == 0)
    def _():
        o_ref[...] = jnp.zeros_like(o_ref)

    support = jnp.dot(
        x_ref[...], w_ref[...], preferred_element_type=jnp.float32
    ).astype(adj_ref.dtype)
    o_ref[...] += jnp.dot(
        adj_ref[...], support, preferred_element_type=jnp.float32
    )


def _fused_bias_kernel(adj_ref, x_ref, w_ref, b_ref, o_ref):
    _fused_kernel(adj_ref, x_ref, w_ref, o_ref)

    @pl.when(pl.program_id(2) == pl.num_programs(2) - 1)
    def _():
        o_ref[...] += b_ref[...]


# ----------------------------- helpers --------------------------------------


def _round_up(x, m):
    return ((x + m - 1) // m) * m


def _pick_tile(padded, target):
    """Largest multiple of 128 that divides `padded` and is <= target."""
    t = max(128, min(padded, (target // 128) * 128))
    while padded % t:
        t -= 128
    return t


def _vmem_limit_bytes():
    # ~48 MiB on v7x (64 MiB VMEM / TensorCore), ~96 MiB on v5e/v6e (128 MiB).
    cap = 64 << 20
    try:
        cap = int(pltpu.get_tpu_info().vmem_capacity_bytes)
    except Exception:
        pass
    return min(cap * 3 // 4, 100 << 20)


def _agg_footprint(tm, tk, din, dout_p, fused, in_bytes):
    """Double-buffered per-step VMEM estimate for the aggregation pallas_call."""
    adj = 2 * tm * tk * in_bytes
    rhs = 2 * tk * (din if fused else dout_p) * in_bytes
    wgt = 2 * din * dout_p * in_bytes if fused else 0
    out = 2 * tm * dout_p * 4
    return adj + rhs + wgt + out + 2 * dout_p * 4


# ----------------------------- wrapper --------------------------------------


def graph_convolution(adjacency, input_feature, weight, bias=None, *,
                      mxu_dtype=jnp.bfloat16, fuse=None):
    """out[b] = adjacency[b] @ (input_feature[b] @ weight) (+ bias)."""
    B, N, N2 = adjacency.shape
    assert N == N2, "adjacency must be (B, N, N)"
    Din, Dout = weight.shape
    assert input_feature.shape == (B, N, Din)
    out_dtype = input_feature.dtype
    in_bytes = jnp.dtype(mxu_dtype).itemsize

    # ---- padding: lane-dense Dout, nodes rounded to 128 only ------------------
    Np = _round_up(N, 128)
    Dout_p = _round_up(Dout, 128)
    if Np != N:
        adjacency = jnp.pad(adjacency, ((0, 0), (0, Np - N), (0, Np - N)))
        input_feature = jnp.pad(input_feature, ((0, 0), (0, Np - N), (0, 0)))
    adj_p = adjacency.astype(mxu_dtype)
    x_p = input_feature.astype(mxu_dtype)
    w_p = jnp.pad(weight, ((0, 0), (0, Dout_p - Dout))).astype(mxu_dtype)
    use_bias = bias is not None
    if use_bias:
        b_p = jnp.pad(bias, (0, Dout_p - Dout)).astype(jnp.float32).reshape(1, Dout_p)

    # ---- tile sizing against the actual VMEM capacity -------------------------
    vmem_limit = _vmem_limit_bytes()
    budget = int(vmem_limit * 0.8)
    big_vmem = vmem_limit >= (80 << 20)           # v5e / v6e
    tm = _pick_tile(Np, 1024 if big_vmem else 512)
    tk = _pick_tile(Np, 2048 if big_vmem else 1024)

    if fuse is None:
        # Fusing recomputes support Np/tm times: cheap iff Din << tm.
        fuse = Din * 8 <= max(tk, 512)
    fuse = bool(fuse)

    while _agg_footprint(tm, tk, Din, Dout_p, fuse, in_bytes) > budget and tk > 128:
        tk = _pick_tile(Np, tk - 128)
    while _agg_footprint(tm, tk, Din, Dout_p, fuse, in_bytes) > budget and tm > 128:
        tm = _pick_tile(Np, tm - 128)
    # v7x megacore: make sure both TensorCores get a row tile when B == 1.
    if B * (Np // tm) < 2 and tm >= 256:
        tm = _pick_tile(Np, tm // 2)

    grid = (B, Np // tm, Np // tk)
    agg_params = pltpu.CompilerParams(
        dimension_semantics=("parallel", "parallel", "arbitrary"),
        vmem_limit_bytes=vmem_limit,
    )
    out_spec = pl.BlockSpec((pl.Squeezed(), tm, Dout_p), lambda b, i, k: (b, i, 0))
    out_shape = jax.ShapeDtypeStruct((B, Np, Dout_p), jnp.float32)

    if fuse:
        # ---- single fused call: out = A @ (X @ W) (+ bias) --------------------
        in_specs = [
            pl.BlockSpec((pl.Squeezed(), tm, tk), lambda b, i, k: (b, i, k)),
            pl.BlockSpec((pl.Squeezed(), tk, Din), lambda b, i, k: (b, k, 0)),
            pl.BlockSpec((Din, Dout_p), lambda b, i, k: (0, 0)),
        ]
        operands = [adj_p, x_p, w_p]
        kernel = _fused_kernel
        if use_bias:
            in_specs.append(pl.BlockSpec((1, Dout_p), lambda b, i, k: (0, 0)))
            operands.append(b_p)
            kernel = _fused_bias_kernel
        out_p = pl.pallas_call(
            kernel,
            out_shape=out_shape,
            grid_spec=pltpu.PrefetchScalarGridSpec(
                num_scalar_prefetch=0, grid=grid,
                in_specs=in_specs, out_specs=out_spec),
            compiler_params=agg_params,
            cost_estimate=pl.CostEstimate(
                flops=2 * B * Np * Np * Dout_p
                      + 2 * B * Np * Din * Dout_p * (Np // tm),
                transcendentals=0,
                bytes_accessed=in_bytes * B * Np * Np
                               + in_bytes * B * Np * Din * (Np // tm)
                               + in_bytes * Din * Dout_p
                               + 4 * B * Np * Dout_p),
        )(*operands)
    else:
        # ---- stage 1: support = X @ W, batch folded into M --------------------
        Mp = B * Np
        tm_s = _pick_tile(Mp, 1024 if big_vmem else 512)
        support = pl.pallas_call(
            _support_kernel,
            out_shape=jax.ShapeDtypeStruct((Mp, Dout_p), mxu_dtype),
            grid_spec=pltpu.PrefetchScalarGridSpec(
                num_scalar_prefetch=0,
                grid=(Mp // tm_s,),
                in_specs=[
                    pl.BlockSpec((tm_s, Din), lambda i: (i, 0)),
                    pl.BlockSpec((Din, Dout_p), lambda i: (0, 0)),
                ],
                out_specs=pl.BlockSpec((tm_s, Dout_p), lambda i: (i, 0))),
            compiler_params=pltpu.CompilerParams(
                dimension_semantics=("parallel",),
                vmem_limit_bytes=vmem_limit),
            cost_estimate=pl.CostEstimate(
                flops=2 * Mp * Din * Dout_p,
                transcendentals=0,
                bytes_accessed=in_bytes * (Mp * Din + Din * Dout_p + Mp * Dout_p)),
        )(x_p.reshape(Mp, Din), w_p)
        support = support.reshape(B, Np, Dout_p)

        # ---- stage 2: out = A @ support (+ bias) -------------------------------
        in_specs = [
            pl.BlockSpec((pl.Squeezed(), tm, tk), lambda b, i, k: (b, i, k)),
            pl.BlockSpec((pl.Squeezed(), tk, Dout_p), lambda b, i, k: (b, k, 0)),
        ]
        operands = [adj_p, support]
        kernel = _agg_kernel
        if use_bias:
            in_specs.append(pl.BlockSpec((1, Dout_p), lambda b, i, k: (0, 0)))
            operands.append(b_p)
            kernel = _agg_bias_kernel
        out_p = pl.pallas_call(
            kernel,
            out_shape=out_shape,
            grid_spec=pltpu.PrefetchScalarGridSpec(
                num_scalar_prefetch=0, grid=grid,
                in_specs=in_specs, out_specs=out_spec),
            compiler_params=agg_params,
            cost_estimate=pl.CostEstimate(
                flops=2 * B * Np * Np * Dout_p,
                transcendentals=0,
                bytes_accessed=in_bytes * B * Np * Np
                               + in_bytes * B * Np * Dout_p * (Np // tm)
                               + 4 * B * Np * Dout_p),
        )(*operands)

    return out_p[:, :N, :Dout].astype(out_dtype)


# ----------------------------- demo / check ----------------------------------


def kaiming_uniform(key, shape, dtype=jnp.float32):
    # Mirror torch.nn.init.kaiming_uniform_ on a (in_features, out_features) tensor.
    fan_in = shape[1]
    bound = jnp.sqrt(2.0) * jnp.sqrt(3.0 / fan_in)
    return jax.random.uniform(key, shape, dtype=dtype, minval=-bound, maxval=bound)


if __name__ == "__main__":
    key = jax.random.PRNGKey(0)
    k_adj, k_x, k_w, k_b = jax.random.split(key, 4)

    B, N = 2, 16            # batch of graphs, nodes per graph
    Din, Dout = 32, 64      # input_dim, output_dim

    adjacency = jax.random.uniform(k_adj, (B, N, N), dtype=jnp.float32)
    input_feature = jax.random.normal(k_x, (B, N, Din), dtype=jnp.float32)
    weight = kaiming_uniform(k_w, (Din, Dout))
    bias = 0.1 * jax.random.normal(k_b, (Dout,), dtype=jnp.float32)

    # Reference mirroring the kernel's bf16 MXU operands with f32 accumulation.
    f32 = jnp.float32
    a16 = adjacency.astype(jnp.bfloat16).astype(f32)
    x16 = input_feature.astype(jnp.bfloat16).astype(f32)
    w16 = weight.astype(jnp.bfloat16).astype(f32)
    support_ref = jnp.einsum("bnd,do->bno", x16, w16)
    support_ref = support_ref.astype(jnp.bfloat16).astype(f32)
    ref = jnp.einsum("bnm,bmo->bno", a16, support_ref)

    ok = True
    for fuse in (None, True, False):   # auto, fused, two-stage
        out = graph_convolution(adjacency, input_feature, weight, bias, fuse=fuse)
        out = jax.block_until_ready(out)
        assert out.shape == (B, N, Dout)
        ok &= bool(jnp.allclose(out, ref + bias, atol=1e-2, rtol=1e-2))

    # bias-free variant
    out_nb = graph_convolution(adjacency, input_feature, weight, None)
    out_nb = jax.block_until_ready(out_nb)
    ok &= bool(jnp.allclose(out_nb, ref, atol=1e-2, rtol=1e-2))

    if not ok:
        raise SystemExit("mismatch vs reference")
    print("KERNEL_OK")
</pallas_src>

<mosaic_0001>
module attributes {stable_mosaic.version = 11 : i64} {
  func.func @_fused_bias_kernel(%arg0: i32, %arg1: i32, %arg2: i32, %arg3: memref<1x128x128xbf16, #tpu.memory_space<vmem>>, %arg4: memref<1x128x32xbf16, #tpu.memory_space<vmem>>, %arg5: memref<32x128xbf16, #tpu.memory_space<vmem>>, %arg6: memref<1x128xf32, #tpu.memory_space<vmem>>, %arg7: memref<1x128x128xf32, #tpu.memory_space<vmem>>) attributes {dimension_semantics = [#tpu.dimension_semantics<parallel>, #tpu.dimension_semantics<parallel>, #tpu.dimension_semantics<arbitrary>], iteration_bounds = array<i64: 2, 1, 1>, scalar_prefetch = 0 : i64, scratch_operands = 0 : i64, tpu.core_type = #tpu.core_type<tc>, window_params = [{transform_indices = @transform_0, window_bounds = array<i64: 1, 128, 128>}, {transform_indices = @transform_1, window_bounds = array<i64: 1, 128, 32>}, {pipeline_mode = #tpu.pipeline_mode<synchronous>, transform_indices = @transform_2, window_bounds = array<i64: 32, 128>}, {pipeline_mode = #tpu.pipeline_mode<synchronous>, transform_indices = @transform_3, window_bounds = array<i64: 1, 128>}, {transform_indices = @transform_4, window_bounds = array<i64: 1, 128, 128>}]} {
    %c0_i32 = arith.constant 0 : i32
    %0 = arith.cmpi eq, %arg2, %c0_i32 : i32
    %1 = arith.extui %0 : i1 to i32
    %c0_i32_0 = arith.constant 0 : i32
    %2 = arith.cmpi ne, %1, %c0_i32_0 : i32
    scf.if %2 {
      %cst_17 = arith.constant 0.000000e+00 : f32
      %20 = vector.broadcast %cst_17 : f32 to vector<128x128xf32>
      %c0_18 = arith.constant 0 : index
      %c0_19 = arith.constant 0 : index
      %c0_20 = arith.constant 0 : index
      %21 = vector.load %arg7[%c0_18, %c0_19, %c0_20] : memref<1x128x128xf32, #tpu.memory_space<vmem>>, vector<1x128x128xf32>
      %22 = vector.shape_cast %21 : vector<1x128x128xf32> to vector<128x128xf32>
      %23 = vector.shape_cast %20 : vector<128x128xf32> to vector<1x128x128xf32>
      tpu.vector_store %arg7[%c0_18, %c0_19, %c0_20], %23 {strides = array<i32>} : memref<1x128x128xf32, #tpu.memory_space<vmem>>, vector<1x128x128xf32>,
    } else {
    }
    %c0 = arith.constant 0 : index
    %c0_1 = arith.constant 0 : index
    %c0_2 = arith.constant 0 : index
    %3 = vector.load %arg4[%c0, %c0_1, %c0_2] : memref<1x128x32xbf16, #tpu.memory_space<vmem>>, vector<1x128x32xbf16>
    %4 = vector.shape_cast %3 : vector<1x128x32xbf16> to vector<128x32xbf16>
    %c0_3 = arith.constant 0 : index
    %c0_4 = arith.constant 0 : index
    %5 = vector.load %arg5[%c0_3, %c0_4] : memref<32x128xbf16, #tpu.memory_space<vmem>>, vector<32x128xbf16>
    %cst = arith.constant dense<0.000000e+00> : vector<128x128xf32>
    %6 = tpu.matmul %4, %5, %cst {dimension_numbers = #tpu.dot_dimension_numbers<[1], [0], [0], [1], [0, 0, 1, 1], [], []>} : vector<128x32xbf16>, vector<32x128xbf16>, vector<128x128xf32> -> vector<128x128xf32>
    %7 = arith.truncf %6 : vector<128x128xf32> to vector<128x128xbf16>
    %c0_5 = arith.constant 0 : index
    %c0_6 = arith.constant 0 : index
    %c0_7 = arith.constant 0 : index
    %8 = vector.load %arg7[%c0_5, %c0_6, %c0_7] : memref<1x128x128xf32, #tpu.memory_space<vmem>>, vector<1x128x128xf32>
    %9 = vector.shape_cast %8 : vector<1x128x128xf32> to vector<128x128xf32>
    %c0_8 = arith.constant 0 : index
    %c0_9 = arith.constant 0 : index
    %c0_10 = arith.constant 0 : index
    %10 = vector.load %arg3[%c0_8, %c0_9, %c0_10] : memref<1x128x128xbf16, #tpu.memory_space<vmem>>, vector<1x128x128xbf16>
    %11 = vector.shape_cast %10 : vector<1x128x128xbf16> to vector<128x128xbf16>
    %cst_11 = arith.constant dense<0.000000e+00> : vector<128x128xf32>
    %12 = tpu.matmul %11, %7, %cst_11 {dimension_numbers = #tpu.dot_dimension_numbers<[1], [0], [0], [1], [0, 0, 1, 1], [], []>} : vector<128x128xbf16>, vector<128x128xbf16>, vector<128x128xf32> -> vector<128x128xf32>
    %13 = arith.addf %9, %12 : vector<128x128xf32>
    %c0_12 = arith.constant 0 : index
    %c0_13 = arith.constant 0 : index
    %c0_14 = arith.constant 0 : index
    %14 = vector.load %arg7[%c0_12, %c0_13, %c0_14] : memref<1x128x128xf32, #tpu.memory_space<vmem>>, vector<1x128x128xf32>
    %15 = vector.shape_cast %14 : vector<1x128x128xf32> to vector<128x128xf32>
    %16 = vector.shape_cast %13 : vector<128x128xf32> to vector<1x128x128xf32>
    tpu.vector_store %arg7[%c0_12, %c0_13, %c0_14], %16 {strides = array<i32>} : memref<1x128x128xf32, #tpu.memory_space<vmem>>, vector<1x128x128xf32>,
    %c0_i32_15 = arith.constant 0 : i32
    %17 = arith.cmpi eq, %arg2, %c0_i32_15 : i32
    %18 = arith.extui %17 : i1 to i32
    %c0_i32_16 = arith.constant 0 : i32
    %19 = arith.cmpi ne, %18, %c0_i32_16 : i32
    scf.if %19 {
      %c0_17 = arith.constant 0 : index
      %c0_18 = arith.constant 0 : index
      %c0_19 = arith.constant 0 : index
      %20 = vector.load %arg7[%c0_17, %c0_18, %c0_19] : memref<1x128x128xf32, #tpu.memory_space<vmem>>, vector<1x128x128xf32>
      %21 = vector.shape_cast %20 : vector<1x128x128xf32> to vector<128x128xf32>
      %c0_20 = arith.constant 0 : index
      %c0_21 = arith.constant 0 : index
      %22 = vector.load %arg6[%c0_20, %c0_21] : memref<1x128xf32, #tpu.memory_space<vmem>>, vector<1x128xf32>
      %23 = vector.broadcast %22 : vector<1x128xf32> to vector<128x128xf32>
      %24 = arith.addf %21, %23 : vector<128x128xf32>
      %c0_22 = arith.constant 0 : index
      %c0_23 = arith.constant 0 : index
      %c0_24 = arith.constant 0 : index
      %25 = vector.load %arg7[%c0_22, %c0_23, %c0_24] : memref<1x128x128xf32, #tpu.memory_space<vmem>>, vector<1x128x128xf32>
      %26 = vector.shape_cast %25 : vector<1x128x128xf32> to vector<128x128xf32>
      %27 = vector.shape_cast %24 : vector<128x128xf32> to vector<1x128x128xf32>
      tpu.vector_store %arg7[%c0_22, %c0_23, %c0_24], %27 {strides = array<i32>} : memref<1x128x128xf32, #tpu.memory_space<vmem>>, vector<1x128x128xf32>,
    } else {
    }
    return
  }
  func.func @transform_0(%arg0: i32, %arg1: i32, %arg2: i32) -> (i32, i32, i32) {
    %c0_i32 = arith.constant 0 : i32
    return %arg0, %arg1, %arg2 : i32, i32, i32
  }
  func.func @transform_1(%arg0: i32, %arg1: i32, %arg2: i32) -> (i32, i32, i32) {
    %c0_i32 = arith.constant 0 : i32
    %c0_i32_0 = arith.constant 0 : i32
    return %arg0, %arg2, %c0_i32 : i32, i32, i32
  }
  func.func @transform_2(%arg0: i32, %arg1: i32, %arg2: i32) -> (i32, i32) {
    %c0_i32 = arith.constant 0 : i32
    %c0_i32_0 = arith.constant 0 : i32
    %c0_i32_1 = arith.constant 0 : i32
    return %c0_i32, %c0_i32_0 : i32, i32
  }
  func.func @transform_3(%arg0: i32, %arg1: i32, %arg2: i32) -> (i32, i32) {
    %c0_i32 = arith.constant 0 : i32
    %c0_i32_0 = arith.constant 0 : i32
    %c0_i32_1 = arith.constant 0 : i32
    return %c0_i32, %c0_i32_0 : i32, i32
  }
  func.func @transform_4(%arg0: i32, %arg1: i32, %arg2: i32) -> (i32, i32, i32) {
    %c0_i32 = arith.constant 0 : i32
    %c0_i32_0 = arith.constant 0 : i32
    return %arg0, %arg1, %c0_i32 : i32, i32, i32
  }
}

</mosaic_0001>

<llo_original>
// kernel: tpu_custom_call.1
$region0: #{tpu_custom_call.1}
  #allocation0 [shape = 'u32[]', space=smem, size = 0x4, offset = 0x4, fixed_abs, tag = 'smem constant byte address 0x4 - core index']
  #allocation1 [shape = 'u32[144,128]{1,0:T(1,128)}', space=vmem, size = 0x12000, scoped, tag = 'internal scratch']
  %s0 = inlined_call_operand.vmem [shape: bf16[2,128,128], index: 0, kind: input, shape index: {}]
  %s1 = inlined_call_operand.vmem [shape: bf16[2,128,32], index: 1, kind: input, shape index: {}]
  %s2 = inlined_call_operand.vmem [shape: bf16[32,128], index: 2, kind: input, shape index: {}]
  %s3 = inlined_call_operand.vmem [shape: f32[1,128], index: 3, kind: input, shape index: {}]
  %s4 = inlined_call_operand.hbm [shape: f32[2,128,128], index: 4, kind: output, shape index: {}]
  %s5 = sld [smem:[#allocation0]]
  $region57: #{tpu_custom_call.1} parent=0
    _
  %s7 = ssub.s32 1, %s5
  %s8 = scalar_select 0, %s7, %s5
  $region1: #{tpu_custom_call.1} parent=0
    #allocation2 [shape = 'u8[131072]{0}', space=vmem, size = 0x20000, scoped, tag = 'output window, operand 0']
    #allocation3 [shape = 's32[2]{0}', space=sflag, size = 0x8, scoped, tag = 'scoped memory for tpu_custom_call.1']
    %9 = vsyncpa [#allocation3], 0
    %s10 = scalar_lea.sflag [#allocation3], 1
    %11 = vsyncpa %s10, 0
    loop: start=0, step=1, limit=4
    $region2: #{tpu_custom_call.1} parent=1 // loop_pre_header
      _
    $region3: #{tpu_custom_call.1} parent=1 // loop_header
      %s13 = sphi 0, %s17
      %p14 = scmp.ge.s32.totalorder %s13, 4
      %s20 = sphi 0, %s39
      %s21 = sphi 0, %s35
      %s22 = sphi 0, %s31
      %s23 = sphi 0, %s20
      %s24 = sphi 0, %s21
      %s25 = sphi 0, %s22
      %s26 = sphi 0, %s23
      %s27 = sphi 0, %s24
      %s28 = sphi 0, %s25
      %s46 = sphi 0, %s48
      %s49 = sphi 0, %s46
      %s50 = sphi 0, %s49
      %s66 = sphi 0, %s50
      %s74 = sphi 0, %s76
      %s77 = sphi 0, %s74
      %s78 = sphi 0, %s77
      %s94 = sphi 0, %s78
      %s98 = sphi 0, %s98
      %s100 = sphi 0, %s98
      %s101 = sphi 0, %s100
      %s115 = sphi 0, %s101
      %s119 = sphi 0, %s119
      %s121 = sphi 0, %s119
      %s122 = sphi 0, %s121
      %s136 = sphi 0, %s122
      %s144 = sphi 0, %s146
      %s147 = sphi 0, %s144
      %s148 = sphi 0, %s147
      %s164 = sphi 0, %s148
    $region4: #{tpu_custom_call.1} parent=1 // loop_header_branch
      %16 = sbr.rel (%p14) target = $region8
    $region5: #{tpu_custom_call.1} parent=1 // loop_body
      %s18 = ssub.s32 %s13, 1
      %s19 = ssub.s32 %s13, 2
      %s29 = sadd.s32 1, %s22
      %p30 = scmp.ge.s32.totalorder %s29, 1
      %s31 = scalar_select %p30, 0, %s29
      %s32 = sadd.s32 1, %s21
      %s33 = scalar_select %p30, %s32, %s21
      %p34 = scmp.ge.s32.totalorder %s33, 1
      %s35 = scalar_select %p34, 0, %s33
      %s36 = sadd.s32 1, %s20
      %s37 = scalar_select %p34, %s36, %s20
      %p38 = scmp.ge.s32.totalorder %s37, 2
      %s39 = scalar_select %p38, 0, %s37
      %s40 = ssub.s32 %s20, %s39
      %s41 = ssub.s32 %s21, %s35
      %s42 = sor.u32 %s40, %s41
      %s43 = ssub.s32 %s22, %s31
      %s44 = sor.u32 %s42, %s43
      %p45 = scmp.eq.s32.totalorder %s44, 0
      %s47 = sadd.s32 %s46, 1
      %s48 = scalar_select %p45, %s46, %s47
      %p51 = pneg %p45
      %p52 = scmp.eq.s32.totalorder %s13, 1
      %p53 = por %p51, %p52
      %p54 = scmp.ne.s32.totalorder %s46, %s49
      %p55 = scmp.eq.s32.totalorder %s13, 0
      %p56 = por %p54, %p55
      %p57 = scmp.ne.s32.totalorder %s46, %s49
      %p58 = scmp.eq.s32.totalorder %s18, 1
      %p59 = por %p57, %p58
      %p60 = scmp.ne.s32.totalorder %s49, %s50
      %p61 = scmp.eq.s32.totalorder %s18, 0
      %p62 = por %p60, %p61
      %p63 = scmp.ne.s32.totalorder %s49, %s50
      %p64 = scmp.eq.s32.totalorder %s19, 1
      %p65 = por %p63, %p64
      %p67 = scmp.ne.s32.totalorder %s50, %s66
      %p68 = scmp.eq.s32.totalorder %s19, 0
      %p69 = por %p67, %p68
      %s70 = ssub.s32 %s20, %s39
      %s71 = ssub.s32 %s22, %s31
      %s72 = sor.u32 %s70, %s71
      %p73 = scmp.eq.s32.totalorder %s72, 0
      %s75 = sadd.s32 %s74, 1
      %s76 = scalar_select %p73, %s74, %s75
      %p79 = pneg %p73
      %p80 = scmp.eq.s32.totalorder %s13, 1
      %p81 = por %p79, %p80
      %p82 = scmp.ne.s32.totalorder %s74, %s77
      %p83 = scmp.eq.s32.totalorder %s13, 0
      %p84 = por %p82, %p83
      %p85 = scmp.ne.s32.totalorder %s74, %s77
      %p86 = scmp.eq.s32.totalorder %s18, 1
      %p87 = por %p85, %p86
      %p88 = scmp.ne.s32.totalorder %s77, %s78
      %p89 = scmp.eq.s32.totalorder %s18, 0
      %p90 = por %p88, %p89
      %p91 = scmp.ne.s32.totalorder %s77, %s78
      %p92 = scmp.eq.s32.totalorder %s19, 1
      %p93 = por %p91, %p92
      %p95 = scmp.ne.s32.totalorder %s78, %s94
      %p96 = scmp.eq.s32.totalorder %s19, 0
      %p97 = por %p95, %p96
      %s99 = sadd.s32 %s98, 1
      %p102 = scmp.eq.s32.totalorder %s13, 1
      %p103 = scmp.ne.s32.totalorder %s98, %s100
      %p104 = scmp.eq.s32.totalorder %s13, 0
      %p105 = por %p103, %p104
      %p106 = scmp.ne.s32.totalorder %s98, %s100
      %p107 = scmp.eq.s32.totalorder %s18, 1
      %p108 = por %p106, %p107
      %p109 = scmp.ne.s32.totalorder %s100, %s101
      %p110 = scmp.eq.s32.totalorder %s18, 0
      %p111 = por %p109, %p110
      %p112 = scmp.ne.s32.totalorder %s100, %s101
      %p113 = scmp.eq.s32.totalorder %s19, 1
      %p114 = por %p112, %p113
      %p116 = scmp.ne.s32.totalorder %s101, %s115
      %p117 = scmp.eq.s32.totalorder %s19, 0
      %p118 = por %p116, %p117
      %s120 = sadd.s32 %s119, 1
      %p123 = scmp.eq.s32.totalorder %s13, 1
      %p124 = scmp.ne.s32.totalorder %s119, %s121
      %p125 = scmp.eq.s32.totalorder %s13, 0
      %p126 = por %p124, %p125
      %p127 = scmp.ne.s32.totalorder %s119, %s121
      %p128 = scmp.eq.s32.totalorder %s18, 1
      %p129 = por %p127, %p128
      %p130 = scmp.ne.s32.totalorder %s121, %s122
      %p131 = scmp.eq.s32.totalorder %s18, 0
      %p132 = por %p130, %p131
      %p133 = scmp.ne.s32.totalorder %s121, %s122
      %p134 = scmp.eq.s32.totalorder %s19, 1
      %p135 = por %p133, %p134
      %p137 = scmp.ne.s32.totalorder %s122, %s136
      %p138 = scmp.eq.s32.totalorder %s19, 0
      %p139 = por %p137, %p138
      %s140 = ssub.s32 %s20, %s39
      %s141 = ssub.s32 %s21, %s35
      %s142 = sor.u32 %s140, %s141
      %p143 = scmp.eq.s32.totalorder %s142, 0
      %s145 = sadd.s32 %s144, 1
      %s146 = scalar_select %p143, %s144, %s145
      %p149 = pneg %p143
      %p150 = scmp.eq.s32.totalorder %s13, 1
      %p151 = por %p149, %p150
      %p152 = scmp.ne.s32.totalorder %s144, %s147
      %p153 = scmp.eq.s32.totalorder %s13, 0
      %p154 = por %p152, %p153
      %p155 = scmp.ne.s32.totalorder %s144, %s147
      %p156 = scmp.eq.s32.totalorder %s18, 1
      %p157 = por %p155, %p156
      %p158 = scmp.ne.s32.totalorder %s147, %s148
      %p159 = scmp.eq.s32.totalorder %s18, 0
      %p160 = por %p158, %p159
      %p161 = scmp.ne.s32.totalorder %s147, %s148
      %p162 = scmp.eq.s32.totalorder %s19, 1
      %p163 = por %p161, %p162
      %p165 = scmp.ne.s32.totalorder %s148, %s164
      %p166 = scmp.eq.s32.totalorder %s19, 0
      %p167 = por %p165, %p166
      %p168 = scmp.le.s32.totalorder 1, %s13
      %p169 = scmp.lt.s32.totalorder %s13, 3
      %p170 = pnand %p168, %p169
      %p171 = pneg %p170
      // Predicated region
      $region9: #{tpu_custom_call.1} parent=5 // pred_check
        _
      $region10: #{tpu_custom_call.1} parent=5 // pred_check_branch
        %173 = sbr.rel (%p170) target = $region12
      $region11: #{tpu_custom_call.1} parent=5 // pred_region
        %s174 = ssub.s32 %s13, 1
        // Predicated region
        $region13: #{tpu_custom_call.1} parent=11 // pred_check
          %p175 = pneg %p111
        $region14: #{tpu_custom_call.1} parent=11 // pred_check_branch
          %177 = sbr.rel (%p175) target = $region16
        $region15: #{tpu_custom_call.1} parent=11 // pred_region
          _
        $region16: #{tpu_custom_call.1} parent=11 // pred_fallthru
          _
        // Predicated region
        $region17: #{tpu_custom_call.1} parent=11 // pred_check
          %p178 = pneg %p132
        $region18: #{tpu_custom_call.1} parent=11 // pred_check_branch
          %180 = sbr.rel (%p178) target = $region20
        $region19: #{tpu_custom_call.1} parent=11 // pred_region
          _
        $region20: #{tpu_custom_call.1} parent=11 // pred_fallthru
          _
      $region12: #{tpu_custom_call.1} parent=5 // pred_fallthru
        _
      %p181 = scmp.lt.s32.totalorder %s13, 2
      // Predicated region
      $region21: #{tpu_custom_call.1} parent=5 // pred_check
        %p182 = pneg %p181
      $region22: #{tpu_custom_call.1} parent=5 // pred_check_branch
        %184 = sbr.rel (%p182) target = $region24
      $region23: #{tpu_custom_call.1} parent=5 // pred_region
        // Predicated region
        $region25: #{tpu_custom_call.1} parent=23 // pred_check
          %p185 = pneg %p56
        $region26: #{tpu_custom_call.1} parent=23 // pred_check_branch
          %187 = sbr.rel (%p185) target = $region28
        $region27: #{tpu_custom_call.1} parent=23 // pred_region
          %s188 = smul.u32 16, %s21
          %p189 = scmp.lt.s32.totalorder %s20, 1
          %s190 = scalar_select %p189, %s20, 1
          %p191 = scmp.lt.s32.totalorder %s188, 15
          %s192 = scalar_select %p191, %s188, 15
          %p193 = scmp.lt.s32.totalorder %s22, 0
          %s194 = scalar_select %p193, %s22, 0
          %s195 = sadd.s32 %s194, %s192
          %s196 = smul.addr %s190, 16
          %s197 = sadd.s32 %s195, %s196
          %s198 = smul.addr %s197, 4
          %s199 = scalar_lea.vmem %s0, %s198
          %s200 = smul.u32 16, %s21
        $region28: #{tpu_custom_call.1} parent=23 // pred_fallthru
          _
        // Predicated region
        $region29: #{tpu_custom_call.1} parent=23 // pred_check
          %p201 = pneg %p84
        $region30: #{tpu_custom_call.1} parent=23 // pred_check_branch
          %203 = sbr.rel (%p201) target = $region32
        $region31: #{tpu_custom_call.1} parent=23 // pred_region
          %s204 = smul.u32 16, %s22
          %p205 = scmp.lt.s32.totalorder %s20, 1
          %s206 = scalar_select %p205, %s20, 1
          %p207 = scmp.lt.s32.totalorder %s204, 15
          %s208 = scalar_select %p207, %s204, 15
          %s209 = smul.addr %s206, 16
          %s210 = sadd.s32 %s208, %s209
          %s211 = smul.addr %s210, 4
          %s212 = scalar_lea.vmem %s1, %s211
          %s213 = smul.u32 16, %s22
        $region32: #{tpu_custom_call.1} parent=23 // pred_fallthru
          _
      $region24: #{tpu_custom_call.1} parent=5 // pred_fallthru
        _
      %p214 = scmp.le.s32.totalorder 1, %s13
      %p215 = scmp.lt.s32.totalorder %s13, 3
      %p216 = pnand %p214, %p215
      %p217 = pneg %p216
      // Predicated region
      $region33: #{tpu_custom_call.1} parent=5 // pred_check
        _
      $region34: #{tpu_custom_call.1} parent=5 // pred_check_branch
        %219 = sbr.rel (%p216) target = $region36
      $region35: #{tpu_custom_call.1} parent=5 // pred_region
        %s220 = ssub.s32 %s13, 1
        %s221 = smul.u32 16, %s24
        %p222 = scmp.lt.s32.totalorder %s23, 1
        %s223 = scalar_select %p222, %s23, 1
        %p224 = scmp.lt.s32.totalorder %s221, 15
        %s225 = scalar_select %p224, %s221, 15
        %p226 = scmp.lt.s32.totalorder %s25, 0
        %s227 = scalar_select %p226, %s25, 0
        %s228 = sadd.s32 %s227, %s225
        %s229 = smul.addr %s223, 16
        %s230 = sadd.s32 %s228, %s229
        %s231 = smul.addr %s230, 4
        %s232 = scalar_lea.vmem %s0, %s231
        %p233 = pneg %p62
        %p234 = pneg %p59
        %s235 = smul.u32 16, %s25
        %p236 = scmp.lt.s32.totalorder %s23, 1
        %s237 = scalar_select %p236, %s23, 1
        %p238 = scmp.lt.s32.totalorder %s235, 15
        %s239 = scalar_select %p238, %s235, 15
        %s240 = smul.addr %s237, 16
        %s241 = sadd.s32 %s239, %s240
        %s242 = smul.addr %s241, 4
        %s243 = scalar_lea.vmem %s1, %s242
        %p244 = pneg %p90
        %p245 = pneg %p87
        %p246 = pneg %p111
        %p247 = pneg %p108
        %p248 = pneg %p132
        %p249 = pneg %p129
        %p250 = pneg %p160
        %p251 = pneg %p157
        %s252 = sand.u32 %s147, 1
        %s253 = scalar_lea.sflag [#allocation3], %s252
        %s254 = sand.u32 %s147, 1
        %s255 = smul.addr %s254, 128
        %s256 = scalar_lea.vmem [#allocation2], %s255
        %s257 = smul.u32 16, %s24
        %p258 = scmp.lt.s32.totalorder %s23, 1
        %s259 = scalar_select %p258, %s23, 1
        %p260 = scmp.lt.s32.totalorder %s257, 15
        %s261 = scalar_select %p260, %s257, 15
        %p262 = scmp.lt.s32.totalorder %s25, 0
        %s263 = scalar_select %p262, %s25, 0
        %s264 = sadd.s32 %s263, %s261
        %s265 = smul.addr %s259, 16
        %s266 = sadd.s32 %s264, %s265
        %s267 = smul.addr %s266, 4
        %s268 = scalar_lea.vmem %s0, %s267
        %s269 = smul.u32 16, %s24
        %s270 = smul.u32 16, %s25
        %p271 = scmp.lt.s32.totalorder %s23, 1
        %s272 = scalar_select %p271, %s23, 1
        %p273 = scmp.lt.s32.totalorder %s270, 15
        %s274 = scalar_select %p273, %s270, 15
        %s275 = smul.addr %s272, 16
        %s276 = sadd.s32 %s274, %s275
        %s277 = smul.addr %s276, 4
        %s278 = scalar_lea.vmem %s1, %s277
        %s279 = smul.u32 16, %s25
        %s280 = smul.u32 16, %s24
        %p282 = scmp.eq.s32.totalorder %s25, 0
        // Predicated region
        $region37: #{tpu_custom_call.1} parent=35 // pred_check
          %p283 = pneg %p282
        $region38: #{tpu_custom_call.1} parent=35 // pred_check_branch
          %285 = sbr.rel (%p283) target = $region40
        $region39: #{tpu_custom_call.1} parent=35 // pred_region
          %286 = vst [vmem:[%s256] sm:$0xff] 0.0
          %287 = vst [vmem:[%s256 + $0x8] sm:$0xff] 0.0
          %288 = vst [vmem:[%s256 + $0x10] sm:$0xff] 0.0
          %289 = vst [vmem:[%s256 + $0x18] sm:$0xff] 0.0
          %290 = vst [vmem:[%s256 + $0x20] sm:$0xff] 0.0
          %291 = vst [vmem:[%s256 + $0x28] sm:$0xff] 0.0
          %292 = vst [vmem:[%s256 + $0x30] sm:$0xff] 0.0
          %293 = vst [vmem:[%s256 + $0x38] sm:$0xff] 0.0
          %294 = vst [vmem:[%s256 + $0x40] sm:$0xff] 0.0
          %295 = vst [vmem:[%s256 + $0x48] sm:$0xff] 0.0
          %296 = vst [vmem:[%s256 + $0x50] sm:$0xff] 0.0
          %297 = vst [vmem:[%s256 + $0x58] sm:$0xff] 0.0
          %298 = vst [vmem:[%s256 + $0x60] sm:$0xff] 0.0
          %299 = vst [vmem:[%s256 + $0x68] sm:$0xff] 0.0
          %300 = vst [vmem:[%s256 + $0x70] sm:$0xff] 0.0
          %301 = vst [vmem:[%s256 + $0x78] sm:$0xff] 0.0
        $region40: #{tpu_custom_call.1} parent=35 // pred_fallthru
          _
        %v302 = vld [vmem:[%s278] sm:$0xf]
        %v303 = vld [vmem:[%s278 + $0x4] sm:$0xf]
        %v304 = vld [vmem:[%s278 + $0x8] sm:$0xf]
        %v305 = vld [vmem:[%s278 + $0xc] sm:$0xf]
        %v306 = vld [vmem:[%s278 + $0x10] sm:$0xf]
        %v307 = vld [vmem:[%s278 + $0x14] sm:$0xf]
        %v308 = vld [vmem:[%s278 + $0x18] sm:$0xf]
        %v309 = vld [vmem:[%s278 + $0x1c] sm:$0xf]
        %v310 = vld [vmem:[%s278 + $0x20] sm:$0xf]
        %v311 = vld [vmem:[%s278 + $0x24] sm:$0xf]
        %v312 = vld [vmem:[%s278 + $0x28] sm:$0xf]
        %v313 = vld [vmem:[%s278 + $0x2c] sm:$0xf]
        %v314 = vld [vmem:[%s278 + $0x30] sm:$0xf]
        %v315 = vld [vmem:[%s278 + $0x34] sm:$0xf]
        %v316 = vld [vmem:[%s278 + $0x38] sm:$0xf]
        %v317 = vld [vmem:[%s278 + $0x3c] sm:$0xf]
        %v318 = vld [vmem:[%s2] sm:$0xf]
        %v319 = vld [vmem:[%s2 + $0x4] sm:$0xf]
        %v320 = vld [vmem:[%s2 + $0x8] sm:$0xf]
        %v321 = vld [vmem:[%s2 + $0xc] sm:$0xf]
        %v338 = vunpack.c.l.b16 %v302
        %v339 = vunpack.c.l.b16 %v303
        %v340 = vunpack.c.l.b16 %v304
        %v341 = vunpack.c.l.b16 %v305
        %v342 = vunpack.c.l.b16 %v306
        %v343 = vunpack.c.l.b16 %v307
        %v344 = vunpack.c.l.b16 %v308
        %v345 = vunpack.c.l.b16 %v309
        %v346 = vunpack.c.l.b16 %v310
        %v347 = vunpack.c.l.b16 %v311
        %v348 = vunpack.c.l.b16 %v312
        %v349 = vunpack.c.l.b16 %v313
        %v350 = vunpack.c.l.b16 %v314
        %v351 = vunpack.c.l.b16 %v315
        %v352 = vunpack.c.l.b16 %v316
        %v353 = vunpack.c.l.b16 %v317
        %v354 = vpack.c.b16 %v339, %v338
        %v355 = vpack.c.b16 %v341, %v340
        %v356 = vpack.c.b16 %v343, %v342
        %v357 = vpack.c.b16 %v345, %v344
        %v358 = vpack.c.b16 %v347, %v346
        %v359 = vpack.c.b16 %v349, %v348
        %v360 = vpack.c.b16 %v351, %v350
        %v361 = vpack.c.b16 %v353, %v352
        %v366 = vunpack.c.l.b16 %v318
        %v367 = vunpack.c.l.b16 %v319
        %v368 = vunpack.c.l.b16 %v320
        %v369 = vunpack.c.l.b16 %v321
        %v370 = vpack.c.b16 %v367, %v366
        %v371 = vpack.c.b16 %v369, %v368
        %vm374 = vcmask 261120
        %v376 = vsel %vm374, %v354, 0
        %v379 = vsel %vm374, %v355, 0
        %v382 = vsel %vm374, %v356, 0
        %v385 = vsel %vm374, %v357, 0
        %v388 = vsel %vm374, %v358, 0
        %v391 = vsel %vm374, %v359, 0
        %v394 = vsel %vm374, %v360, 0
        %v397 = vsel %vm374, %v361, 0
        %399 = vmatprep.subr.bf16.mxu0 0
        %400 = vmatpush1.bf16.msra.mxu0 %v370
        %401 = vmatprep.subr.bf16.mxu0 0
        %402 = vmatpush1.bf16.msra.mxu0 %v371
        %403 = vmatprep.subr.bf16.mxu0 0
        %404 = vmatpush1.bf16.msra.mxu0 0
        %405 = vmatprep.subr.bf16.mxu0 0
        %406 = vmatpush1.bf16.msra.mxu0 0
        %407 = vmatprep.subr.bf16.mxu0 0
        %408 = vmatpush1.bf16.msra.mxu0 0
        %409 = vmatprep.subr.bf16.mxu0 0
        %410 = vmatpush1.bf16.msra.mxu0 0
        %411 = vmatprep.subr.bf16.mxu0 0
        %412 = vmatpush1.bf16.msra.mxu0 0
        %413 = vmatprep.subr.bf16.mxu0 0
        %414 = vmatpush1.bf16.msra.mxu0 0
        %415 = vmatprep.subr.bf16.mxu0 0
        %416 = vmatpush1.bf16.msra.mxu0 0
        %417 = vmatprep.subr.bf16.mxu0 0
        %418 = vmatpush1.bf16.msra.mxu0 0
        %419 = vmatprep.subr.bf16.mxu0 0
        %420 = vmatpush1.bf16.msra.mxu0 0
        %421 = vmatprep.subr.bf16.mxu0 0
        %422 = vmatpush1.bf16.msra.mxu0 0
        %423 = vmatprep.subr.bf16.mxu0 0
        %424 = vmatpush1.bf16.msra.mxu0 0
        %425 = vmatprep.subr.bf16.mxu0 0
        %426 = vmatpush1.bf16.msra.mxu0 0
        %427 = vmatprep.subr.bf16.mxu0 0
        %428 = vmatpush1.bf16.msra.mxu0 0
        %429 = vmatprep.subr.bf16.mxu0 0
        %430 = vmatpush1.bf16.msra.mxu0 0
        %431 = vmatprep.mubr.bf16.mxu0 0
        %432 = vmatmul.mubr.bf16.gmra.mrb[0].mxu0 %v376
        %v433 = vpop.f32.mrb[0].mxu0
        %v434 = vadd.f32 0.0, %v433
        %v435 = vpop.f32.mrb[0].mxu0
        %v436 = vpop.f32.mrb[0].mxu0
        %v437 = vadd.f32 0.0, %v436
        %v438 = vpop.f32.mrb[0].mxu0
        %439 = vmatprep.mubr.bf16.mxu0 0
        %440 = vmatmul.mubr.bf16.gmra.mrb[0].mxu0 %v379
        %v441 = vpop.f32.mrb[0].mxu0
        %v442 = vadd.f32 0.0, %v441
        %v443 = vpop.f32.mrb[0].mxu0
        %v444 = vpop.f32.mrb[0].mxu0
        %v445 = vadd.f32 0.0, %v444
        %v446 = vpop.f32.mrb[0].mxu0
        %447 = vmatprep.mubr.bf16.mxu0 0
        %448 = vmatmul.mubr.bf16.gmra.mrb[0].mxu0 %v382
        %v449 = vpop.f32.mrb[0].mxu0
        %v450 = vadd.f32 0.0, %v449
        %v451 = vpop.f32.mrb[0].mxu0
        %v452 = vpop.f32.mrb[0].mxu0
        %v453 = vadd.f32 0.0, %v452
        %v454 = vpop.f32.mrb[0].mxu0
        %455 = vmatprep.mubr.bf16.mxu0 0
        %456 = vmatmul.mubr.bf16.gmra.mrb[0].mxu0 %v385
        %v457 = vpop.f32.mrb[0].mxu0
        %v458 = vadd.f32 0.0, %v457
        %v459 = vpop.f32.mrb[0].mxu0
        %v460 = vpop.f32.mrb[0].mxu0
        %v461 = vadd.f32 0.0, %v460
        %v462 = vpop.f32.mrb[0].mxu0
        %463 = vmatprep.mubr.bf16.mxu0 0
        %464 = vmatmul.mubr.bf16.gmra.mrb[0].mxu0 %v388
        %v465 = vpop.f32.mrb[0].mxu0
        %v466 = vadd.f32 0.0, %v465
        %v467 = vpop.f32.mrb[0].mxu0
        %v468 = vpop.f32.mrb[0].mxu0
        %v469 = vadd.f32 0.0, %v468
        %v470 = vpop.f32.mrb[0].mxu0
        %471 = vmatprep.mubr.bf16.mxu0 0
        %472 = vmatmul.mubr.bf16.gmra.mrb[0].mxu0 %v391
        %v473 = vpop.f32.mrb[0].mxu0
        %v474 = vadd.f32 0.0, %v473
        %v475 = vpop.f32.mrb[0].mxu0
        %v476 = vpop.f32.mrb[0].mxu0
        %v477 = vadd.f32 0.0, %v476
        %v478 = vpop.f32.mrb[0].mxu0
        %479 = vmatprep.mubr.bf16.mxu0 0
        %480 = vmatmul.mubr.bf16.gmra.mrb[0].mxu0 %v394
        %v481 = vpop.f32.mrb[0].mxu0
        %v482 = vadd.f32 0.0, %v481
        %v483 = vpop.f32.mrb[0].mxu0
        %v484 = vpop.f32.mrb[0].mxu0
        %v485 = vadd.f32 0.0, %v484
        %v486 = vpop.f32.mrb[0].mxu0
        %487 = vmatprep.mubr.bf16.mxu0 0
        %488 = vmatmul.mubr.bf16.gmra.mrb[0].mxu0 %v397
        %v489 = vpop.f32.mrb[0].mxu0
        %v490 = vadd.f32 0.0, %v489
        %v491 = vpop.f32.mrb[0].mxu0
        %v492 = vpop.f32.mrb[0].mxu0
        %v493 = vadd.f32 0.0, %v492
        %v494 = vpop.f32.mrb[0].mxu0
        %495 = vdwg.mxu0
        %v496 = vpack.c.bf16 %v437, %v434
        %v497 = vpack.c.bf16 %v445, %v442
        %v498 = vpack.c.bf16 %v453, %v450
        %v499 = vpack.c.bf16 %v461, %v458
        %v500 = vpack.c.bf16 %v469, %v466
        %v501 = vpack.c.bf16 %v477, %v474
        %v502 = vpack.c.bf16 %v485, %v482
        %v503 = vpack.c.bf16 %v493, %v490
        %v504 = vld [vmem:[%s256] sm:$0xff]
        %v505 = vld [vmem:[%s256 + $0x8] sm:$0xff]
        %v506 = vld [vmem:[%s256 + $0x10] sm:$0xff]
        %v507 = vld [vmem:[%s256 + $0x18] sm:$0xff]
        %v508 = vld [vmem:[%s256 + $0x20] sm:$0xff]
        %v509 = vld [vmem:[%s256 + $0x28] sm:$0xff]
        %v510 = vld [vmem:[%s256 + $0x30] sm:$0xff]
        %v511 = vld [vmem:[%s256 + $0x38] sm:$0xff]
        %v512 = vld [vmem:[%s256 + $0x40] sm:$0xff]
        %v513 = vld [vmem:[%s256 + $0x48] sm:$0xff]
        %v514 = vld [vmem:[%s256 + $0x50] sm:$0xff]
        %v515 = vld [vmem:[%s256 + $0x58] sm:$0xff]
        %v516 = vld [vmem:[%s256 + $0x60] sm:$0xff]
        %v517 = vld [vmem:[%s256 + $0x68] sm:$0xff]
        %v518 = vld [vmem:[%s256 + $0x70] sm:$0xff]
        %v519 = vld [vmem:[%s256 + $0x78] sm:$0xff]
        %v520 = vld [vmem:[%s268] sm:$0xf]
        %v521 = vld [vmem:[%s268 + $0x4] sm:$0xf]
        %v522 = vld [vmem:[%s268 + $0x8] sm:$0xf]
        %v523 = vld [vmem:[%s268 + $0xc] sm:$0xf]
        %v524 = vld [vmem:[%s268 + $0x10] sm:$0xf]
        %v525 = vld [vmem:[%s268 + $0x14] sm:$0xf]
        %v526 = vld [vmem:[%s268 + $0x18] sm:$0xf]
        %v527 = vld [vmem:[%s268 + $0x1c] sm:$0xf]
        %v528 = vld [vmem:[%s268 + $0x20] sm:$0xf]
        %v529 = vld [vmem:[%s268 + $0x24] sm:$0xf]
        %v530 = vld [vmem:[%s268 + $0x28] sm:$0xf]
        %v531 = vld [vmem:[%s268 + $0x2c] sm:$0xf]
        %v532 = vld [vmem:[%s268 + $0x30] sm:$0xf]
        %v533 = vld [vmem:[%s268 + $0x34] sm:$0xf]
        %v534 = vld [vmem:[%s268 + $0x38] sm:$0xf]
        %v535 = vld [vmem:[%s268 + $0x3c] sm:$0xf]
        %v552 = vunpack.c.l.b16 %v520
        %v553 = vunpack.c.l.b16 %v521
        %v554 = vunpack.c.l.b16 %v522
        %v555 = vunpack.c.l.b16 %v523
        %v556 = vunpack.c.l.b16 %v524
        %v557 = vunpack.c.l.b16 %v525
        %v558 = vunpack.c.l.b16 %v526
        %v559 = vunpack.c.l.b16 %v527
        %v560 = vunpack.c.l.b16 %v528
        %v561 = vunpack.c.l.b16 %v529
        %v562 = vunpack.c.l.b16 %v530
        %v563 = vunpack.c.l.b16 %v531
        %v564 = vunpack.c.l.b16 %v532
        %v565 = vunpack.c.l.b16 %v533
        %v566 = vunpack.c.l.b16 %v534
        %v567 = vunpack.c.l.b16 %v535
        %v568 = vpack.c.b16 %v553, %v552
        %v569 = vpack.c.b16 %v555, %v554
        %v570 = vpack.c.b16 %v557, %v556
        %v571 = vpack.c.b16 %v559, %v558
        %v572 = vpack.c.b16 %v561, %v560
        %v573 = vpack.c.b16 %v563, %v562
        %v574 = vpack.c.b16 %v565, %v564
        %v575 = vpack.c.b16 %v567, %v566
        %584 = vmatprep.subr.bf16.mxu0 0
        %585 = vmatpush1.bf16.msra.mxu0 %v496
        %586 = vmatprep.subr.bf16.mxu0 0
        %587 = vmatpush1.bf16.msra.mxu0 %v497
        %588 = vmatprep.subr.bf16.mxu0 0
        %589 = vmatpush1.bf16.msra.mxu0 %v498
        %590 = vmatprep.subr.bf16.mxu0 0
        %591 = vmatpush1.bf16.msra.mxu0 %v499
        %592 = vmatprep.subr.bf16.mxu0 0
        %593 = vmatpush1.bf16.msra.mxu0 %v500
        %594 = vmatprep.subr.bf16.mxu0 0
        %595 = vmatpush1.bf16.msra.mxu0 %v501
        %596 = vmatprep.subr.bf16.mxu0 0
        %597 = vmatpush1.bf16.msra.mxu0 %v502
        %598 = vmatprep.subr.bf16.mxu0 0
        %599 = vmatpush1.bf16.msra.mxu0 %v503
        %600 = vmatprep.subr.bf16.mxu0 0
        %601 = vmatpush1.bf16.msra.mxu0 0
        %602 = vmatprep.subr.bf16.mxu0 0
        %603 = vmatpush1.bf16.msra.mxu0 0
        %604 = vmatprep.subr.bf16.mxu0 0
        %605 = vmatpush1.bf16.msra.mxu0 0
        %606 = vmatprep.subr.bf16.mxu0 0
        %607 = vmatpush1.bf16.msra.mxu0 0
        %608 = vmatprep.subr.bf16.mxu0 0
        %609 = vmatpush1.bf16.msra.mxu0 0
        %610 = vmatprep.subr.bf16.mxu0 0
        %611 = vmatpush1.bf16.msra.mxu0 0
        %612 = vmatprep.subr.bf16.mxu0 0
        %613 = vmatpush1.bf16.msra.mxu0 0
        %614 = vmatprep.subr.bf16.mxu0 0
        %615 = vmatpush1.bf16.msra.mxu0 0
        %616 = vmatprep.mubr.bf16.mxu0 0
        %617 = vmatmul.mubr.bf16.gmra.mrb[0].mxu0 %v568
        %v618 = vpop.f32.mrb[0].mxu0
        %v619 = vadd.f32 0.0, %v618
        %v620 = vpop.f32.mrb[0].mxu0
        %v621 = vpop.f32.mrb[0].mxu0
        %v622 = vadd.f32 0.0, %v621
        %v623 = vpop.f32.mrb[0].mxu0
        %624 = vmatprep.mubr.bf16.mxu0 0
        %625 = vmatmul.mubr.bf16.gmra.mrb[0].mxu0 %v569
        %v626 = vpop.f32.mrb[0].mxu0
        %v627 = vadd.f32 0.0, %v626
        %v628 = vpop.f32.mrb[0].mxu0
        %v629 = vpop.f32.mrb[0].mxu0
        %v630 = vadd.f32 0.0, %v629
        %v631 = vpop.f32.mrb[0].mxu0
        %632 = vmatprep.mubr.bf16.mxu0 0
        %633 = vmatmul.mubr.bf16.gmra.mrb[0].mxu0 %v570
        %v634 = vpop.f32.mrb[0].mxu0
        %v635 = vadd.f32 0.0, %v634
        %v636 = vpop.f32.mrb[0].mxu0
        %v637 = vpop.f32.mrb[0].mxu0
        %v638 = vadd.f32 0.0, %v637
        %v639 = vpop.f32.mrb[0].mxu0
        %640 = vmatprep.mubr.bf16.mxu0 0
        %641 = vmatmul.mubr.bf16.gmra.mrb[0].mxu0 %v571
        %v642 = vpop.f32.mrb[0].mxu0
        %v643 = vadd.f32 0.0, %v642
        %v644 = vpop.f32.mrb[0].mxu0
        %v645 = vpop.f32.mrb[0].mxu0
        %v646 = vadd.f32 0.0, %v645
        %v647 = vpop.f32.mrb[0].mxu0
        %648 = vmatprep.mubr.bf16.mxu0 0
        %649 = vmatmul.mubr.bf16.gmra.mrb[0].mxu0 %v572
        %v650 = vpop.f32.mrb[0].mxu0
        %v651 = vadd.f32 0.0, %v650
        %v652 = vpop.f32.mrb[0].mxu0
        %v653 = vpop.f32.mrb[0].mxu0
        %v654 = vadd.f32 0.0, %v653
        %v655 = vpop.f32.mrb[0].mxu0
        %656 = vmatprep.mubr.bf16.mxu0 0
        %657 = vmatmul.mubr.bf16.gmra.mrb[0].mxu0 %v573
        %v658 = vpop.f32.mrb[0].mxu0
        %v659 = vadd.f32 0.0, %v658
        %v660 = vpop.f32.mrb[0].mxu0
        %v661 = vpop.f32.mrb[0].mxu0
        %v662 = vadd.f32 0.0, %v661
        %v663 = vpop.f32.mrb[0].mxu0
        %664 = vmatprep.mubr.bf16.mxu0 0
        %665 = vmatmul.mubr.bf16.gmra.mrb[0].mxu0 %v574
        %v666 = vpop.f32.mrb[0].mxu0
        %v667 = vadd.f32 0.0, %v666
        %v668 = vpop.f32.mrb[0].mxu0
        %v669 = vpop.f32.mrb[0].mxu0
        %v670 = vadd.f32 0.0, %v669
        %v671 = vpop.f32.mrb[0].mxu0
        %672 = vmatprep.mubr.bf16.mxu0 0
        %673 = vmatmul.mubr.bf16.gmra.mrb[0].mxu0 %v575
        %v674 = vpop.f32.mrb[0].mxu0
        %v675 = vadd.f32 0.0, %v674
        %v676 = vpop.f32.mrb[0].mxu0
        %v677 = vpop.f32.mrb[0].mxu0
        %v678 = vadd.f32 0.0, %v677
        %v679 = vpop.f32.mrb[0].mxu0
        %680 = vdwg.mxu0
        %v681 = vadd.f32 %v504, %v619
        %v682 = vadd.f32 %v505, %v622
        %v683 = vadd.f32 %v506, %v627
        %v684 = vadd.f32 %v507, %v630
        %v685 = vadd.f32 %v508, %v635
        %v686 = vadd.f32 %v509, %v638
        %v687 = vadd.f32 %v510, %v643
        %v688 = vadd.f32 %v511, %v646
        %v689 = vadd.f32 %v512, %v651
        %v690 = vadd.f32 %v513, %v654
        %v691 = vadd.f32 %v514, %v659
        %v692 = vadd.f32 %v515, %v662
        %v693 = vadd.f32 %v516, %v667
        %v694 = vadd.f32 %v517, %v670
        %v695 = vadd.f32 %v518, %v675
        %v696 = vadd.f32 %v519, %v678
        %697 = vst [vmem:[%s256] sm:$0xff] %v681
        %698 = vst [vmem:[%s256 + $0x8] sm:$0xff] %v682
        %699 = vst [vmem:[%s256 + $0x10] sm:$0xff] %v683
        %700 = vst [vmem:[%s256 + $0x18] sm:$0xff] %v684
        %701 = vst [vmem:[%s256 + $0x20] sm:$0xff] %v685
        %702 = vst [vmem:[%s256 + $0x28] sm:$0xff] %v686
        %703 = vst [vmem:[%s256 + $0x30] sm:$0xff] %v687
        %704 = vst [vmem:[%s256 + $0x38] sm:$0xff] %v688
        %705 = vst [vmem:[%s256 + $0x40] sm:$0xff] %v689
        %706 = vst [vmem:[%s256 + $0x48] sm:$0xff] %v690
        %707 = vst [vmem:[%s256 + $0x50] sm:$0xff] %v691
        %708 = vst [vmem:[%s256 + $0x58] sm:$0xff] %v692
        %709 = vst [vmem:[%s256 + $0x60] sm:$0xff] %v693
        %710 = vst [vmem:[%s256 + $0x68] sm:$0xff] %v694
        %711 = vst [vmem:[%s256 + $0x70] sm:$0xff] %v695
        %712 = vst [vmem:[%s256 + $0x78] sm:$0xff] %v696
        // Predicated region
        $region41: #{tpu_custom_call.1} parent=35 // pred_check
          %p713 = pneg %p282
        $region42: #{tpu_custom_call.1} parent=35 // pred_check_branch
          %715 = sbr.rel (%p713) target = $region44
        $region43: #{tpu_custom_call.1} parent=35 // pred_region
          %v716 = vld [vmem:[%s256] sm:$0xff]
          %v717 = vld [vmem:[%s256 + $0x8] sm:$0xff]
          %v718 = vld [vmem:[%s256 + $0x10] sm:$0xff]
          %v719 = vld [vmem:[%s256 + $0x18] sm:$0xff]
          %v720 = vld [vmem:[%s256 + $0x20] sm:$0xff]
          %v721 = vld [vmem:[%s256 + $0x28] sm:$0xff]
          %v722 = vld [vmem:[%s256 + $0x30] sm:$0xff]
          %v723 = vld [vmem:[%s256 + $0x38] sm:$0xff]
          %v724 = vld [vmem:[%s256 + $0x40] sm:$0xff]
          %v725 = vld [vmem:[%s256 + $0x48] sm:$0xff]
          %v726 = vld [vmem:[%s256 + $0x50] sm:$0xff]
          %v727 = vld [vmem:[%s256 + $0x58] sm:$0xff]
          %v728 = vld [vmem:[%s256 + $0x60] sm:$0xff]
          %v729 = vld [vmem:[%s256 + $0x68] sm:$0xff]
          %v730 = vld [vmem:[%s256 + $0x70] sm:$0xff]
          %v731 = vld [vmem:[%s256 + $0x78] sm:$0xff]
          %v732 = vld [vmem:[%s3] sm:$0x1]
          %v734 = vlaneseq
          %v735 = vshrl.u32 %v734, 7
          %v736 = vsub.s32 0, %v735
          %v737 = vrot.slane %v732, %v736
          %v739 = vadd.f32 %v716, %v737
          %v740 = vadd.f32 %v717, %v737
          %v741 = vadd.f32 %v718, %v737
          %v742 = vadd.f32 %v719, %v737
          %v743 = vadd.f32 %v720, %v737
          %v744 = vadd.f32 %v721, %v737
          %v745 = vadd.f32 %v722, %v737
          %v746 = vadd.f32 %v723, %v737
          %v747 = vadd.f32 %v724, %v737
          %v748 = vadd.f32 %v725, %v737
          %v749 = vadd.f32 %v726, %v737
          %v750 = vadd.f32 %v727, %v737
          %v751 = vadd.f32 %v728, %v737
          %v752 = vadd.f32 %v729, %v737
          %v753 = vadd.f32 %v730, %v737
          %v754 = vadd.f32 %v731, %v737
          %755 = vst [vmem:[%s256] sm:$0xff] %v739
          %756 = vst [vmem:[%s256 + $0x8] sm:$0xff] %v740
          %757 = vst [vmem:[%s256 + $0x10] sm:$0xff] %v741
          %758 = vst [vmem:[%s256 + $0x18] sm:$0xff] %v742
          %759 = vst [vmem:[%s256 + $0x20] sm:$0xff] %v743
          %760 = vst [vmem:[%s256 + $0x28] sm:$0xff] %v744
          %761 = vst [vmem:[%s256 + $0x30] sm:$0xff] %v745
          %762 = vst [vmem:[%s256 + $0x38] sm:$0xff] %v746
          %763 = vst [vmem:[%s256 + $0x40] sm:$0xff] %v747
          %764 = vst [vmem:[%s256 + $0x48] sm:$0xff] %v748
          %765 = vst [vmem:[%s256 + $0x50] sm:$0xff] %v749
          %766 = vst [vmem:[%s256 + $0x58] sm:$0xff] %v750
          %767 = vst [vmem:[%s256 + $0x60] sm:$0xff] %v751
          %768 = vst [vmem:[%s256 + $0x68] sm:$0xff] %v752
          %769 = vst [vmem:[%s256 + $0x70] sm:$0xff] %v753
          %770 = vst [vmem:[%s256 + $0x78] sm:$0xff] %v754
        $region44: #{tpu_custom_call.1} parent=35 // pred_fallthru
          _
        %s771 = sand.u32 %s147, 1
        %s772 = scalar_lea.sflag [#allocation3], %s771
        %s773 = sand.u32 %s147, 1
        %s774 = smul.addr %s773, 128
        %s775 = scalar_lea.vmem [#allocation2], %s774
        // Predicated region
        $region45: #{tpu_custom_call.1} parent=35 // pred_check
          %p776 = pneg %p157
        $region46: #{tpu_custom_call.1} parent=35 // pred_check_branch
          %778 = sbr.rel (%p776) target = $region48
        $region47: #{tpu_custom_call.1} parent=35 // pred_region
          %s779 = smul.u32 16, %s24
          %s781 = ssub.s32 2048, 2048
          %782 = vsyncadd %s772, %s781
          %s783 = smul.addr %s23, 16
          %s784 = sadd.s32 %s779, %s783
          %s785 = smul.addr %s784, 128
          %s786 = scalar_lea.hbm %s4, %s785
          %s787 = sshll.u32 %s775, 4
          %s788 = int_to_ptr.vmem [resolvable:$true] %s787
          %793 = dma.vmem_to_hbm [thread:$0]  %s788, 2048, %s786, %s772, 128, 128, 8
        $region48: #{tpu_custom_call.1} parent=35 // pred_fallthru
          _
      $region36: #{tpu_custom_call.1} parent=5 // pred_fallthru
        _
      %p794 = scmp.le.s32.totalorder 2, %s13
      // Predicated region
      $region49: #{tpu_custom_call.1} parent=5 // pred_check
        %p795 = pneg %p794
      $region50: #{tpu_custom_call.1} parent=5 // pred_check_branch
        %797 = sbr.rel (%p795) target = $region52
      $region51: #{tpu_custom_call.1} parent=5 // pred_region
        %s798 = ssub.s32 %s13, 2
        // Predicated region
        $region53: #{tpu_custom_call.1} parent=51 // pred_check
          %p799 = pneg %p163
        $region54: #{tpu_custom_call.1} parent=51 // pred_check_branch
          %801 = sbr.rel (%p799) target = $region56
        $region55: #{tpu_custom_call.1} parent=51 // pred_region
          %s802 = sand.u32 %s148, 1
          %s803 = scalar_lea.sflag [#allocation3], %s802
          %s804 = sand.u32 %s148, 1
          %s805 = smul.addr %s804, 128
          %s806 = scalar_lea.vmem [#allocation2], %s805
          %807 = dma.done %s803, 2048
        $region56: #{tpu_custom_call.1} parent=51 // pred_fallthru
          _
      $region52: #{tpu_custom_call.1} parent=5 // pred_fallthru
        _
    $region6: #{tpu_custom_call.1} parent=1 // loop_footer
      %s17 = sadd.s32 1, %s13
    $region7: #{tpu_custom_call.1} parent=1 // loop_footer_branch
      %12 = sbr.rel target = $region3
    $region8: #{tpu_custom_call.1} parent=1 // loop_exit
      _
    %808 = vsyncpa [#allocation3], 1
    %s809 = scalar_lea.sflag [#allocation3], 1
    %810 = vsyncpa %s809, 1

</llo_original>
